<compile_context>
chip_gen: v7x
topology: tpu7x:2x2x1
jax: 0.10.0
libtpu: 0.0.40
codegen_flags: <defaults>
</compile_context>

<pallas_src>
import jax
import jax.numpy as jnp
from jax.experimental import pallas as pl
from jax.experimental.pallas import tpu as pltpu


def _dropout_encoder_kernel(u_ref, p_ref, x_ref, o_ref):
    """Per-feature dropout: zero whole columns where uniform(0,1) <= p."""
    drop = u_ref[...] <= p_ref[0]            # (1, D) bool, shared per tile
    x = x_ref[...]                           # (TB, D) batch tile
    o_ref[...] = jnp.where(drop, jnp.zeros_like(x), x).astype(o_ref.dtype)


def dropout_encoder(x, p, seed, training=True, *, block_rows=None):
    """JAX/Pallas equivalent of DropoutEncoder(p).forward(x)."""
    if not training:
        return x

    B, D = x.shape
    itemsize = jnp.dtype(x.dtype).itemsize

    # Per-feature uniforms (one value per column), deterministic in `seed`.
    u = jax.random.uniform(jax.random.PRNGKey(seed), (1, D), dtype=jnp.float32)
    p_arr = jnp.asarray([p], dtype=jnp.float32)

    # ---- batch tile selection ------------------------------------------------
    sublane = max(8, 32 // itemsize)          # 8 rows f32, 16 bf16, 32 int8
    if block_rows is None:
        vmem_budget = 24 * 1024 * 1024        # 2 buffers x (in + out) tiles
        tb = vmem_budget // max(1, 4 * D * itemsize)
        tb = min(1024, tb)
    else:
        tb = block_rows
    if tb >= B:
        tb = B                                # full-extent block is always legal
    else:
        tb = max(sublane, (tb // sublane) * sublane)
    grid = (pl.cdiv(B, tb),)

    return pl.pallas_call(
        _dropout_encoder_kernel,
        out_shape=jax.ShapeDtypeStruct((B, D), x.dtype),
        grid=grid,
        in_specs=[
            pl.BlockSpec((1, D), lambda i: (0, 0)),                 # uniforms (resident)
            pl.BlockSpec(memory_space=pltpu.MemorySpace.SMEM),      # p scalar
            pl.BlockSpec((tb, D), lambda i: (i, 0)),                # x batch tile
        ],
        out_specs=pl.BlockSpec((tb, D), lambda i: (i, 0)),
        compiler_params=pltpu.CompilerParams(
            dimension_semantics=("parallel",),
            vmem_limit_bytes=32 * 1024 * 1024,
        ),
        cost_estimate=pl.CostEstimate(
            flops=0,
            transcendentals=0,
            bytes_accessed=2 * B * D * itemsize + D * 4,
        ),
    )(u, p_arr, x)


if __name__ == "__main__":
    key = jax.random.PRNGKey(0)
    B, D = 8, 128          # small (batch, feature) shape, tile-friendly
    p = 0.5

    x = jax.random.normal(key, (B, D), dtype=jnp.float32)

    out = dropout_encoder(x, p=p, seed=1234, training=True)
    out = jax.block_until_ready(out)

    # Sanity: every column is either untouched or zeroed entirely.
    col_zero = jnp.all(out == 0.0, axis=0)
    col_same = jnp.all(out == x, axis=0)
    assert bool(jnp.all(col_zero | col_same)), "per-feature mask semantics violated"
    assert out.shape == x.shape and out.dtype == x.dtype

    # Determinism: same seed -> same result.
    out2 = jax.block_until_ready(dropout_encoder(x, p=p, seed=1234, training=True))
    assert bool(jnp.all(out == out2))

    # Eval mode is identity.
    out_eval = dropout_encoder(x, p=p, seed=1234, training=False)
    assert bool(jnp.all(out_eval == x))

    print("KERNEL_OK")
</pallas_src>

<mosaic_0001>
module attributes {stable_mosaic.version = 11 : i64} {
  func.func @_dropout_encoder_kernel(%arg0: i32, %arg1: memref<1x128xf32, #tpu.memory_space<vmem>>, %arg2: memref<1xf32, #tpu.memory_space<smem>>, %arg3: memref<8x128xf32, #tpu.memory_space<vmem>>, %arg4: memref<8x128xf32, #tpu.memory_space<vmem>>) attributes {dimension_semantics = [#tpu.dimension_semantics<parallel>], iteration_bounds = array<i64: 1>, scalar_prefetch = 0 : i64, scratch_operands = 0 : i64, tpu.core_type = #tpu.core_type<tc>, window_params = [{pipeline_mode = #tpu.pipeline_mode<synchronous>, transform_indices = @transform_0, window_bounds = array<i64: 1, 128>}, {transform_indices = @transform_1, window_bounds = array<i64: 1>}, {transform_indices = @transform_2, window_bounds = array<i64: 8, 128>}, {transform_indices = @transform_3, window_bounds = array<i64: 8, 128>}]} {
    %c0 = arith.constant 0 : index
    %c0_0 = arith.constant 0 : index
    %0 = vector.load %arg1[%c0, %c0_0] : memref<1x128xf32, #tpu.memory_space<vmem>>, vector<1x128xf32>
    %c0_1 = arith.constant 0 : index
    %1 = memref.load %arg2[%c0_1] : memref<1xf32, #tpu.memory_space<smem>>
    %2 = vector.broadcast %1 : f32 to vector<1x128xf32>
    %3 = arith.cmpf ole, %0, %2 : vector<1x128xf32>
    %c0_2 = arith.constant 0 : index
    %c0_3 = arith.constant 0 : index
    %4 = vector.load %arg3[%c0_2, %c0_3] : memref<8x128xf32, #tpu.memory_space<vmem>>, vector<8x128xf32>
    %cst = arith.constant 0.000000e+00 : f32
    %5 = vector.broadcast %cst : f32 to vector<8x128xf32>
    %6 = vector.shape_cast %3 : vector<1x128xi1> to vector<1x128xi1>
    %7 = vector.broadcast %6 : vector<1x128xi1> to vector<8x128xi1>
    %8 = arith.select %7, %5, %4 : vector<8x128xi1>, vector<8x128xf32>
    %c0_4 = arith.constant 0 : index
    %c0_5 = arith.constant 0 : index
    %9 = vector.load %arg4[%c0_4, %c0_5] : memref<8x128xf32, #tpu.memory_space<vmem>>, vector<8x128xf32>
    tpu.vector_store %arg4[%c0_4, %c0_5], %8 {strides = array<i32>} : memref<8x128xf32, #tpu.memory_space<vmem>>, vector<8x128xf32>,
    return
  }
  func.func @transform_0(%arg0: i32) -> (i32, i32) {
    %c0_i32 = arith.constant 0 : i32
    %c0_i32_0 = arith.constant 0 : i32
    %c0_i32_1 = arith.constant 0 : i32
    return %c0_i32, %c0_i32_0 : i32, i32
  }
  func.func @transform_1(%arg0: i32) -> i32 {
    %c0_i32 = arith.constant 0 : i32
    %c0_i32_0 = arith.constant 0 : i32
    return %c0_i32 : i32
  }
  func.func @transform_2(%arg0: i32) -> (i32, i32) {
    %c0_i32 = arith.constant 0 : i32
    %c0_i32_0 = arith.constant 0 : i32
    return %arg0, %c0_i32 : i32, i32
  }
  func.func @transform_3(%arg0: i32) -> (i32, i32) {
    %c0_i32 = arith.constant 0 : i32
    %c0_i32_0 = arith.constant 0 : i32
    return %arg0, %c0_i32 : i32, i32
  }
}

</mosaic_0001>

<llo_original>
// kernel: tpu_custom_call.1
$region0: #{tpu_custom_call.1}
  #allocation0 [shape = 'u32[]', space=smem, size = 0x4, offset = 0x4, fixed_abs, tag = 'smem constant byte address 0x4 - core index']
  #allocation1 [shape = 'u32[144,128]{1,0:T(1,128)}', space=vmem, size = 0x12000, scoped, tag = 'internal scratch']
  #allocation2 [shape = 'f32[1]{0:T(128)S(6)}', space=smem, size = 0x200, scoped, tag = 'scoped memory for tpu_custom_call.1']
  %s0 = inlined_call_operand.vmem [shape: f32[1,128], index: 0, kind: input, shape index: {}]
  %s1 = inlined_call_operand.<no memory space> [shape: f32[1], index: 1, kind: input, shape index: {}]
  %s2 = inlined_call_operand.hbm [shape: f32[8,128], index: 2, kind: input, shape index: {}]
  %s3 = inlined_call_operand.hbm [shape: f32[8,128], index: 3, kind: output, shape index: {}]
  %s4 = sld [smem:[#allocation0]]
  $region26: #{tpu_custom_call.1} parent=0
    _
  %s6 = ssub.s32 1, %s4
  %s7 = scalar_select 0, %s6, %s4
  %8 = sst [smem:[#allocation2]] %s1
  $region1: #{tpu_custom_call.1} parent=0
    #allocation3 [shape = 'u8[4096]{0}', space=vmem, size = 0x1000, scoped, tag = 'input window, operand 2, single buffered']
    #allocation4 [shape = 's32[1]{0}', space=sflag, size = 0x4, scoped, tag = 'scoped memory for tpu_custom_call.1']
    #allocation5 [shape = 's32[1]{0}', space=sflag, size = 0x4, scoped, tag = 'scoped memory for tpu_custom_call.1']
    #allocation6 [shape = 'u8[4096]{0}', space=vmem, size = 0x1000, scoped, tag = 'output window, operand 0, single buffered']
    %9 = vsyncpa [#allocation4], 0
    %10 = vsyncpa [#allocation5], 0
    // Predicated region
    $region2: #{tpu_custom_call.1} parent=1 // pred_check
      _
    $region3: #{tpu_custom_call.1} parent=1 // pred_check_branch
      %12 = sbr.rel (0) target = $region5
    $region4: #{tpu_custom_call.1} parent=1 // pred_region
      _
    $region5: #{tpu_custom_call.1} parent=1 // pred_fallthru
      _
    // Predicated region
    $region6: #{tpu_custom_call.1} parent=1 // pred_check
      _
    $region7: #{tpu_custom_call.1} parent=1 // pred_check_branch
      %14 = sbr.rel (0) target = $region9
    $region8: #{tpu_custom_call.1} parent=1 // pred_region
      _
    $region9: #{tpu_custom_call.1} parent=1 // pred_fallthru
      _
    // Predicated region
    $region10: #{tpu_custom_call.1} parent=1 // pred_check
      _
    $region11: #{tpu_custom_call.1} parent=1 // pred_check_branch
      %16 = sbr.rel (0) target = $region13
    $region12: #{tpu_custom_call.1} parent=1 // pred_region
      %s18 = ssub.s32 128, 128
      %19 = vsyncadd [#allocation4], %s18
      %s21 = sshll.u32 [#allocation3], 4
      %s22 = int_to_ptr.vmem [resolvable:$true] %s21
      %24 = dma.hbm_to_vmem [thread:$0]  %s2, 128, %s22, [#allocation4]
    $region13: #{tpu_custom_call.1} parent=1 // pred_fallthru
      _
    // Predicated region
    $region14: #{tpu_custom_call.1} parent=1 // pred_check
      _
    $region15: #{tpu_custom_call.1} parent=1 // pred_check_branch
      %26 = sbr.rel (0) target = $region17
    $region16: #{tpu_custom_call.1} parent=1 // pred_region
      %27 = dma.done [#allocation4], 128
    $region17: #{tpu_custom_call.1} parent=1 // pred_fallthru
      _
    %v28 = vld [vmem:[%s0] sm:$0x1]
    %s29 = sld [smem:[#allocation2]]
    %v30 = vstv %s29
    %vm31 = vcmp.le.f32.partialorder %v28, %v30
    %v32 = vld [vmem:[#allocation3] sm:$0xff]
    %v33 = vsel %vm31, 1, 0
    %v34 = vlaneseq
    %v35 = vshrl.u32 %v34, 7
    %v36 = vsub.s32 0, %v35
    %v37 = vrot.slane %v33, %v36
    %vm38 = vcmp.eq.s32.totalorder %v37, 1
    %v39 = vsel %vm38, 0.0, %v32
    %40 = vst [vmem:[#allocation6] sm:$0xff] %v39
    // Predicated region
    $region18: #{tpu_custom_call.1} parent=1 // pred_check
      _
    $region19: #{tpu_custom_call.1} parent=1 // pred_check_branch
      %42 = sbr.rel (0) target = $region21
    $region20: #{tpu_custom_call.1} parent=1 // pred_region
      %s44 = ssub.s32 128, 128
      %45 = vsyncadd [#allocation5], %s44
      %s47 = sshll.u32 [#allocation6], 4
      %s48 = int_to_ptr.vmem [resolvable:$true] %s47
      %50 = dma.vmem_to_hbm [thread:$0]  %s48, 128, %s3, [#allocation5]
    $region21: #{tpu_custom_call.1} parent=1 // pred_fallthru
      _
    // Predicated region
    $region22: #{tpu_custom_call.1} parent=1 // pred_check
      _
    $region23: #{tpu_custom_call.1} parent=1 // pred_check_branch
      %52 = sbr.rel (0) target = $region25
    $region24: #{tpu_custom_call.1} parent=1 // pred_region
      %53 = dma.done [#allocation5], 128
    $region25: #{tpu_custom_call.1} parent=1 // pred_fallthru
      _
    %54 = vsyncpa [#allocation4], 1
    %55 = vsyncpa [#allocation5], 1

</llo_original>
